<compile_context>
chip_gen: v6e
topology: v6e:2x2x1
jax: 0.10.0
libtpu: 0.0.40
codegen_flags: <defaults>
</compile_context>

<pallas_src>
import functools

import jax
import jax.numpy as jnp
from jax.experimental import pallas as pl
from jax.experimental.pallas import tpu as pltpu

_LANES = 128
_MIB = 1024 * 1024


def _ce_partial_kernel(preds_ref, labels_ref, ce_ref, *, n_true, tile_n):
    """Per-batch-tile sum of cross-entropy NLL (numerically stable LSE)."""
    i = pl.program_id(0)

    preds = preds_ref[...].astype(jnp.float32)          # (tile_n, C)
    labels = labels_ref[...]                            # (tile_n, 1) int32
    tn, c = preds.shape

    row_max = jnp.max(preds, axis=-1, keepdims=True)    # (tile_n, 1)
    shifted = preds - row_max                           # (tile_n, C)
    lse = jnp.log(jnp.sum(jnp.exp(shifted), axis=-1, keepdims=True))

    class_ids = jax.lax.broadcasted_iota(jnp.int32, (tn, c), 1)
    target_logit = jnp.sum(
        jnp.where(class_ids == labels, shifted, 0.0), axis=-1, keepdims=True)

    nll = lse - target_logit                            # (tile_n, 1)

    # Ragged last tile: rows past the true batch size hold undefined data.
    # Mask per-row BEFORE any cross-row reduction.
    row_ids = i * tile_n + jax.lax.broadcasted_iota(jnp.int32, (tn, 1), 0)
    nll = jnp.where(row_ids < n_true, nll, 0.0)

    ce_ref[...] = jnp.broadcast_to(jnp.sum(nll), ce_ref.shape)


def _sublane(dtype):
    # 8 for f32, 16 for bf16, 32 for int8.
    return max(8, 32 // int(jnp.dtype(dtype).itemsize))


def _tile_plan(n, c, dtype):
    """Pick (tile_n, num_tiles, vmem_limit_bytes), generation-aware."""
    itemsize = int(jnp.dtype(dtype).itemsize)
    sub = _sublane(dtype)

    try:
        vmem_cap = int(pltpu.get_tpu_info().vmem_capacity_bytes)
    except Exception:
        vmem_cap = 64 * _MIB                             # conservative (v7x-like)

    if vmem_cap >= 100 * _MIB:                           # v5e / v6e: 128 MiB VMEM
        target_tile_bytes = 16 * _MIB
        vmem_limit = 64 * _MIB
        small_vmem = False
    else:                                                # v7x: 64 MiB per TC
        target_tile_bytes = 7 * _MIB
        vmem_limit = 44 * _MIB
        small_vmem = True

    row_bytes = max(1, c * itemsize)
    tile_n = (target_tile_bytes // row_bytes // sub) * sub
    tile_n = max(sub, tile_n)
    if tile_n >= n:
        tile_n = n                                       # single full-extent block
    num_tiles = (n + tile_n - 1) // tile_n

    # v7x: the "parallel" grid axis is sharded across 2 TensorCores; make sure
    # both get work when the whole batch would otherwise be a single tile.
    if small_vmem and num_tiles < 2 and n >= 2 * sub:
        half = (n + 1) // 2
        tile_n = max(sub, ((half + sub - 1) // sub) * sub)
        num_tiles = (n + tile_n - 1) // tile_n

    return tile_n, num_tiles, vmem_limit


def custom_loss(fs_weight, preds, mask):
    """fs_weight: float tensor (any shape); preds: (N, C) logits (f32 or bf16);
    mask: (N,) integer class labels.  Returns scalar f32 loss."""
    n, c = preds.shape
    itemsize = int(jnp.dtype(preds.dtype).itemsize)

    tile_n, num_tiles, vmem_limit = _tile_plan(n, c, preds.dtype)
    labels2d = mask.astype(jnp.int32).reshape(n, 1)

    kernel = functools.partial(_ce_partial_kernel, n_true=n, tile_n=tile_n)

    cost = pl.CostEstimate(
        flops=int(6 * n * c),
        transcendentals=int(n * c + n),
        bytes_accessed=int(n * c * itemsize + n * 4 + num_tiles * 8 * _LANES * 4),
    )

    ce_parts = pl.pallas_call(
        kernel,
        out_shape=jax.ShapeDtypeStruct((num_tiles, 8, _LANES), jnp.float32),
        grid_spec=pltpu.PrefetchScalarGridSpec(
            num_scalar_prefetch=0,
            grid=(num_tiles,),
            in_specs=[
                pl.BlockSpec((tile_n, c), lambda i: (i, 0)),   # preds tile
                pl.BlockSpec((tile_n, 1), lambda i: (i, 0)),   # labels tile
            ],
            out_specs=pl.BlockSpec((1, 8, _LANES), lambda i: (i, 0, 0)),
        ),
        compiler_params=pltpu.CompilerParams(
            dimension_semantics=("parallel",),
            vmem_limit_bytes=int(vmem_limit),
        ),
        cost_estimate=cost,
    )(preds, labels2d)

    ce = jnp.sum(ce_parts[:, 0, 0]) / jnp.float32(n)

    # Regularizer: tiny elementwise reduction -> plain JAX (one fused HBM pass),
    # keeps fs_weight out of the tiled kernel's VMEM budget entirely.
    w = fs_weight.astype(jnp.float32)
    reg = jnp.sum(1.0 - (jnp.abs(w) / 0.99 - 1.0) ** 2)

    return ce + reg


if __name__ == "__main__":
    key = jax.random.PRNGKey(0)
    k1, k2, k3 = jax.random.split(key, 3)

    N, C = 8, 32          # batch, num classes
    R = 4                 # fs_weight rows (arbitrary weight tensor)

    preds = jax.random.normal(k1, (N, C), dtype=jnp.float32)
    mask = jax.random.randint(k2, (N,), 0, C, dtype=jnp.int32)
    fs_weight = jax.random.normal(k3, (R, C), dtype=jnp.float32) * 0.5

    loss = custom_loss(fs_weight, preds, mask)
    jax.block_until_ready(loss)

    # Pure-JAX reference (same semantics as torch CrossEntropyLoss + reg).
    logp = jax.nn.log_softmax(preds, axis=-1)
    ce_ref = -jnp.mean(logp[jnp.arange(N), mask])
    reg_ref = jnp.sum(1.0 - (jnp.abs(fs_weight) / 0.99 - 1.0) ** 2)
    ref = ce_ref + reg_ref
    assert jnp.allclose(loss, ref, rtol=1e-5, atol=1e-5), (loss, ref)

    print("KERNEL_OK")
</pallas_src>

<mosaic_0001>
module attributes {stable_mosaic.version = 11 : i64} {
  func.func @_ce_partial_kernel(%arg0: i32, %arg1: memref<8x32xf32, #tpu.memory_space<vmem>>, %arg2: memref<8x1xi32, #tpu.memory_space<vmem>>, %arg3: memref<1x8x128xf32, #tpu.memory_space<vmem>>) attributes {dimension_semantics = [#tpu.dimension_semantics<parallel>], iteration_bounds = array<i64: 1>, scalar_prefetch = 0 : i64, scratch_operands = 0 : i64, tpu.core_type = #tpu.core_type<tc>, window_params = [{transform_indices = @transform_0, window_bounds = array<i64: 8, 32>}, {transform_indices = @transform_1, window_bounds = array<i64: 8, 1>}, {transform_indices = @transform_2, window_bounds = array<i64: 1, 8, 128>}]} {
    %c0 = arith.constant 0 : index
    %c0_0 = arith.constant 0 : index
    %0 = vector.load %arg1[%c0, %c0_0] : memref<8x32xf32, #tpu.memory_space<vmem>>, vector<8x32xf32>
    %c0_1 = arith.constant 0 : index
    %c0_2 = arith.constant 0 : index
    %1 = vector.load %arg2[%c0_1, %c0_2] : memref<8x1xi32, #tpu.memory_space<vmem>>, vector<8x1xi32>
    %cst = arith.constant dense<0xFF800000> : vector<8xf32>
    %2 = vector.multi_reduction <maximumf>, %0, %cst [1] : vector<8x32xf32> to vector<8xf32>
    %3 = vector.shape_cast %2 : vector<8xf32> to vector<8x1xf32>
    %4 = vector.broadcast %3 : vector<8x1xf32> to vector<8x32xf32>
    %5 = arith.subf %0, %4 : vector<8x32xf32>
    %6 = math.exp %5 : vector<8x32xf32>
    %cst_3 = arith.constant dense<0.000000e+00> : vector<8xf32>
    %7 = vector.multi_reduction <add>, %6, %cst_3 [1] : vector<8x32xf32> to vector<8xf32>
    %8 = vector.shape_cast %7 : vector<8xf32> to vector<8x1xf32>
    %9 = math.log %8 : vector<8x1xf32>
    %10 = tpu.iota {dimensions = array<i32: 1>} : vector<8x32xi32>
    %11 = vector.broadcast %1 : vector<8x1xi32> to vector<8x32xi32>
    %12 = arith.cmpi eq, %10, %11 : vector<8x32xi32>
    %cst_4 = arith.constant 0.000000e+00 : f32
    %13 = vector.broadcast %cst_4 : f32 to vector<8x32xf32>
    %14 = arith.select %12, %5, %13 : vector<8x32xi1>, vector<8x32xf32>
    %cst_5 = arith.constant dense<0.000000e+00> : vector<8xf32>
    %15 = vector.multi_reduction <add>, %14, %cst_5 [1] : vector<8x32xf32> to vector<8xf32>
    %16 = vector.shape_cast %15 : vector<8xf32> to vector<8x1xf32>
    %17 = arith.subf %9, %16 : vector<8x1xf32>
    %c8_i32 = arith.constant 8 : i32
    %18 = arith.muli %arg0, %c8_i32 : i32
    %19 = tpu.iota {dimensions = array<i32: 0>} : vector<8x1xi32>
    %20 = vector.broadcast %18 : i32 to vector<8x1xi32>
    %21 = arith.addi %20, %19 : vector<8x1xi32>
    %c8_i32_6 = arith.constant 8 : i32
    %22 = vector.broadcast %c8_i32_6 : i32 to vector<8x1xi32>
    %23 = arith.cmpi slt, %21, %22 : vector<8x1xi32>
    %cst_7 = arith.constant 0.000000e+00 : f32
    %24 = vector.broadcast %cst_7 : f32 to vector<8x1xf32>
    %25 = arith.select %23, %17, %24 : vector<8x1xi1>, vector<8x1xf32>
    %26 = vector.shape_cast %25 : vector<8x1xf32> to vector<1x8x1xf32>
    %cst_8 = arith.constant dense<0.000000e+00> : vector<1xf32>
    %27 = vector.multi_reduction <add>, %26, %cst_8 [1, 2] : vector<1x8x1xf32> to vector<1xf32>
    %28 = vector.shape_cast %27 : vector<1xf32> to vector<1x1x1xf32>
    %29 = vector.extract %28[0, 0, 0] : f32 from vector<1x1x1xf32>
    %30 = vector.broadcast %29 : f32 to vector<1x8x128xf32>
    %c0_9 = arith.constant 0 : index
    %c0_10 = arith.constant 0 : index
    %c0_11 = arith.constant 0 : index
    %31 = vector.load %arg3[%c0_9, %c0_10, %c0_11] : memref<1x8x128xf32, #tpu.memory_space<vmem>>, vector<1x8x128xf32>
    tpu.vector_store %arg3[%c0_9, %c0_10, %c0_11], %30 {strides = array<i32>} : memref<1x8x128xf32, #tpu.memory_space<vmem>>, vector<1x8x128xf32>,
    return
  }
  func.func @transform_0(%arg0: i32) -> (i32, i32) {
    %c0_i32 = arith.constant 0 : i32
    %c0_i32_0 = arith.constant 0 : i32
    return %arg0, %c0_i32 : i32, i32
  }
  func.func @transform_1(%arg0: i32) -> (i32, i32) {
    %c0_i32 = arith.constant 0 : i32
    %c0_i32_0 = arith.constant 0 : i32
    return %arg0, %c0_i32 : i32, i32
  }
  func.func @transform_2(%arg0: i32) -> (i32, i32, i32) {
    %c0_i32 = arith.constant 0 : i32
    %c0_i32_0 = arith.constant 0 : i32
    %c0_i32_1 = arith.constant 0 : i32
    return %arg0, %c0_i32, %c0_i32_0 : i32, i32, i32
  }
}

</mosaic_0001>

<llo_original>
// kernel: tpu_custom_call.1
$region0: #{tpu_custom_call.1}
  #allocation0 [shape = 'u32[]', space=smem, size = 0x4, offset = 0x4, fixed_abs, tag = 'smem constant byte address 0x4 - core index']
  #allocation1 [shape = 'u32[144,128]{1,0:T(1,128)}', space=vmem, size = 0x12000, scoped, tag = 'internal scratch']
  %s0 = inlined_call_operand.vmem [shape: f32[8,32], index: 0, kind: input, shape index: {}]
  %s1 = inlined_call_operand.vmem [shape: s32[8,1], index: 1, kind: input, shape index: {}]
  %s2 = inlined_call_operand.hbm [shape: f32[1,8,128], index: 2, kind: output, shape index: {}]
  %s3 = sld [smem:[#allocation0]]
  $region18: #{tpu_custom_call.1} parent=0
    _
  %s5 = ssub.s32 1, %s3
  %s6 = scalar_select 0, %s5, %s3
  $region1: #{tpu_custom_call.1} parent=0
    #allocation2 [shape = 'u8[4096]{0}', space=vmem, size = 0x1000, scoped, tag = 'output window, operand 0, single buffered']
    #allocation3 [shape = 's32[1]{0}', space=sflag, size = 0x4, scoped, tag = 'scoped memory for tpu_custom_call.1']
    %7 = vsyncpa [#allocation3], 0
    // Predicated region
    $region2: #{tpu_custom_call.1} parent=1 // pred_check
      _
    $region3: #{tpu_custom_call.1} parent=1 // pred_check_branch
      %9 = sbr.rel (0) target = $region5
    $region4: #{tpu_custom_call.1} parent=1 // pred_region
      _
    $region5: #{tpu_custom_call.1} parent=1 // pred_fallthru
      _
    // Predicated region
    $region6: #{tpu_custom_call.1} parent=1 // pred_check
      _
    $region7: #{tpu_custom_call.1} parent=1 // pred_check_branch
      %11 = sbr.rel (0) target = $region9
    $region8: #{tpu_custom_call.1} parent=1 // pred_region
      _
    $region9: #{tpu_custom_call.1} parent=1 // pred_fallthru
      _
    %v12 = vld [vmem:[%s0] sm:$0xff]
    %v13 = vld [vmem:[%s1] sm:$0xff]
    %vm14 = vcmask 261120
    %v15 = vsel %vm14, %v12, -inf
    %16 = vmax.xlane.f32.xlu0 %v15
    %v17 = vpop.xlane.xlu0 %16
    %v18 = vsub.f32 %v12, %v17
    %v19 = vmul.f32 %v18, 1.442695
    %v20 = vpow.pop %v19
    %v21 = vsel %vm14, %v20, 0.0
    %22 = vadd.xlane.f32.xlu0 %v21
    %v23 = vpop.xlane.xlu0 %22
    %v24 = vlog2.pop %v23
    %v25 = vmul.f32 %v24, 0.6931472
    %v26 = vlaneseq
    %v27 = vand.u32 %v26, 127
    %28 = vset.pattern.permute.xlu0 0
    %29 = vperm.xlu0 %28, %v13
    %v30 = vpop.permute.xlu0 %29
    %vm31 = vcmp.eq.s32.totalorder %v27, %v30
    %v32 = vsel %vm31, %v18, 0.0
    %v33 = vsel %vm14, %v32, 0.0
    %34 = vadd.xlane.f32.xlu0 %v33
    %v35 = vpop.xlane.xlu0 %34
    %v36 = vsub.f32 %v25, %v35
    %s37 = smul.u32 0, 8
    %v38 = vlaneseq
    %v39 = vshrl.u32 %v38, 7
    %v40 = vstv %s37
    %v41 = vadd.s32 %v40, %v39
    %vm42 = vcmp.lt.s32.totalorder %v41, 8
    %v43 = vsel %vm42, %v36, 0.0
    %vm44 = vcmask 7168
    %v45 = vsel %vm44, %v43, 0.0
    %46 = vadd.xlane.f32.xlu0 %v45
    %v47 = vpop.xlane.xlu0 %46
    %v48 = vrot.slane %v47, 4
    %v49 = vadd.f32 %v47, %v48
    %v50 = vrot.slane %v49, 2
    %v51 = vadd.f32 %v49, %v50
    %v52 = vrot.slane %v51, 1
    %v53 = vadd.f32 %v51, %v52
    %s54 = vtos %v53
    %v55 = vstv %s54
    %56 = vst [vmem:[#allocation2] sm:$0xff] %v55
    // Predicated region
    $region10: #{tpu_custom_call.1} parent=1 // pred_check
      _
    $region11: #{tpu_custom_call.1} parent=1 // pred_check_branch
      %58 = sbr.rel (0) target = $region13
    $region12: #{tpu_custom_call.1} parent=1 // pred_region
      %s60 = ssub.s32 128, 128
      %61 = vsyncadd [#allocation3], %s60
      %s63 = sshll.u32 [#allocation2], 4
      %s64 = int_to_ptr.vmem [resolvable:$true] %s63
      %66 = dma.vmem_to_hbm [thread:$0]  %s64, 128, %s2, [#allocation3]
    $region13: #{tpu_custom_call.1} parent=1 // pred_fallthru
      _
    // Predicated region
    $region14: #{tpu_custom_call.1} parent=1 // pred_check
      _
    $region15: #{tpu_custom_call.1} parent=1 // pred_check_branch
      %68 = sbr.rel (0) target = $region17
    $region16: #{tpu_custom_call.1} parent=1 // pred_region
      %69 = dma.done [#allocation3], 128
    $region17: #{tpu_custom_call.1} parent=1 // pred_fallthru
      _
    %70 = vsyncpa [#allocation3], 1

</llo_original>
